<compile_context>
chip_gen: v5e
topology: v5e:2x2
jax: 0.10.0
libtpu: 0.0.40
codegen_flags: <defaults>
</compile_context>

<pallas_src>
import numpy as np

import jax
import jax.numpy as jnp
from jax import lax
from jax.experimental import pallas as pl
from jax.experimental.pallas import tpu as pltpu

EPS = 1e-5


def _make_kernel(N, H, W, Cin, Cout):
    NH, WCout = N * H, W * Cout
    inv_count = 1.0 / (N * H * W)

    def row_shifts(a):
        """(prev_row, a, next_row) for a lane-dense (N*H, cols) image stack; shifts that cross an
        image boundary are zeroed. jnp.roll is used here because the shift direction matters."""
        nh, cols = a.shape
        h = lax.broadcasted_iota(jnp.int32, (nh, cols), 0) % H
        prev = jnp.where(h == 0, 0.0, jnp.roll(a, 1, axis=0))       # row h-1 (zero at image top)
        nxt = jnp.where(h == H - 1, 0.0, jnp.roll(a, -1, axis=0))   # row h+1 (zero at image bottom)
        return prev, a, nxt

    def ch_fold_tiled(row_sums):
        """Per-(w, c) sums (1, W*Cout) -> per-channel sums replicated into every w slot (1, W*Cout).
        Uses log2(W) XLU lane rotations (wrap-around sum is direction-agnostic) when W is a power
        of two, otherwise a 1-vreg reshape fold."""
        if W & (W - 1) == 0:
            s = row_sums
            shift = Cout
            while shift < WCout:
                s = s + pltpu.roll(s, shift=shift, axis=1)
                shift *= 2
            return s
        per_ch = jnp.sum(row_sums.reshape(W, Cout), axis=0, keepdims=True)          # (1, Cout)
        return jnp.broadcast_to(per_ch.reshape(1, 1, Cout), (1, W, Cout)).reshape(1, WCout)

    def bn_sigmoid(acc, gamma_ld, beta_ld):
        """Training-mode BatchNorm (batch stats over N*H*W per channel) + sigmoid, all lane-dense."""
        mean = ch_fold_tiled(jnp.sum(acc, axis=0, keepdims=True)) * inv_count        # (1, W*Cout)
        xc = acc - mean
        var = ch_fold_tiled(jnp.sum(xc * xc, axis=0, keepdims=True)) * inv_count     # two-pass var
        return jax.nn.sigmoid(xc * (gamma_ld * lax.rsqrt(var + EPS)) + beta_ld)

    def kernel(x_ref, w1b_ref, w2b_ref, g1_ref, be1_ref, g2_ref, be2_ref, o_ref):
        # x_ref   : (N*H, W*Cin)        lane-dense NHWC input
        # w1b_ref : (3, W*Cin, W*Cout)  conv1 band RHS, one slab per kernel row dy
        # w2b_ref : (3*W*Cout, W*Cout)  conv2 band RHS, dy-major
        # g*/be*  : (1, W*Cout)         BN gamma/beta, pre-tiled to the lane-dense layout
        # o_ref   : (N*H, W*Cout)       lane-dense output
        x = x_ref[...]

        # ---- conv1: 3 whole-batch MXU dots (one per kernel row), lane-dense 128-wide output -----
        p1, m1, n1 = row_shifts(x)
        acc1 = jnp.dot(p1, w1b_ref[0], preferred_element_type=jnp.float32)
        acc1 = acc1 + jnp.dot(m1, w1b_ref[1], preferred_element_type=jnp.float32)
        acc1 = acc1 + jnp.dot(n1, w1b_ref[2], preferred_element_type=jnp.float32)

        # ---- bn1 + sigmoid (f32, lane-dense) -----------------------------------------------------
        act1 = bn_sigmoid(acc1, g1_ref[...], be1_ref[...])                            # (N*H, W*Cout)

        # ---- conv2: 128-aligned lane concat of the 3 row shifts -> ONE MXU dot, K = 3*W*Cout -----
        a1 = act1.astype(w2b_ref.dtype)
        p2, m2, n2 = row_shifts(a1)
        lhs2 = jnp.concatenate([p2, m2, n2], axis=1)                                  # (N*H, 3*W*Cout)
        acc2 = jnp.dot(lhs2, w2b_ref[...], preferred_element_type=jnp.float32)

        # ---- bn2 + sigmoid straight into the lane-dense output ------------------------------------
        o_ref[...] = bn_sigmoid(acc2, g2_ref[...], be2_ref[...])

    return kernel


def _band_rhs(wk, W):
    """(3,3,Ci,Co) HWIO 3x3 kernel -> per-dy band matrices (3, W*Ci, W*Co) with
    B[dy, wi*Ci+ci, wo*Co+co] = wk[dy, wi-wo+1, ci, co] (zero outside the +-1 band), so that
    conv_SAME(x)[.., wo, co] = sum_dy row_shift(x, dy-1) @ B[dy]. Weight-only layout plumbing."""
    sel = np.zeros((W, W, 3), np.float32)                 # sel[wi, wo, dx] = [wi == wo + dx - 1]
    for wo in range(W):
        for dx in range(3):
            wi = wo + dx - 1
            if 0 <= wi < W:
                sel[wi, wo, dx] = 1.0
    _, _, Ci, Co = wk.shape
    band = jnp.einsum("iod,ydcf->yicof", jnp.asarray(sel), wk.astype(jnp.float32))
    return band.reshape(3, W * Ci, W * Co)


def _compiler_params():
    # Generation-aware VMEM limit: ~48 MiB on v7x (64 MiB VMEM/TC), 64 MiB on v5e/v6e (128 MiB).
    try:
        cap = pltpu.get_tpu_info().vmem_capacity_bytes
        return pltpu.CompilerParams(vmem_limit_bytes=min((cap * 3) // 4, 64 * 1024 * 1024))
    except Exception:
        return pltpu.CompilerParams()   # fall back to compiler defaults


def upsampling_block(x_nchw, w1, gamma1, beta1, w2, gamma2, beta2, matmul_dtype=jnp.float32):
    """Fused conv3x3 -> BN -> sigmoid -> conv3x3 -> BN -> sigmoid.
    x_nchw: (N, Cin, H, W); w1: (3,3,Cin,Cout) HWIO; w2: (3,3,Cout,Cout) HWIO. Returns NCHW.
    Set matmul_dtype=jnp.bfloat16 on v6e/v7x (MXU-native operands; f32 accumulation & BN kept)."""
    N, Cin, H, W = x_nchw.shape
    Cout = w1.shape[-1]

    # Layout plumbing only (same footprint as the input -- no im2col blow-up in HBM).
    x_ld = jnp.transpose(x_nchw, (0, 2, 3, 1)).reshape(N * H, W * Cin).astype(matmul_dtype)
    w1_band = _band_rhs(w1, W).astype(matmul_dtype)                                # (3, W*Cin, W*Cout)
    w2_band = _band_rhs(w2, W).astype(matmul_dtype).reshape(3 * W * Cout, W * Cout)

    def tile_ld(v):                                                                # (Cout,) -> (1, W*Cout)
        return jnp.tile(v.reshape(1, Cout).astype(jnp.float32), (1, W))

    vmem = pl.BlockSpec(memory_space=pltpu.MemorySpace.VMEM)
    out_ld = pl.pallas_call(
        _make_kernel(N, H, W, Cin, Cout),
        out_shape=jax.ShapeDtypeStruct((N * H, W * Cout), jnp.float32),
        in_specs=[vmem] * 7,
        out_specs=vmem,
        compiler_params=_compiler_params(),
    )(x_ld, w1_band, w2_band, tile_ld(gamma1), tile_ld(beta1), tile_ld(gamma2), tile_ld(beta2))

    # Layout plumbing back to NCHW (outside the kernel).
    return jnp.transpose(out_ld.reshape(N, H, W, Cout), (0, 3, 1, 2))


def reference_forward(x_nchw, w1, g1, b1, w2, g2, b2):
    """Pure-JAX reference mirroring the PyTorch module's training-mode forward."""
    def conv(x, w):
        return lax.conv_general_dilated(x, w, window_strides=(1, 1), padding="SAME",
                                        dimension_numbers=("NCHW", "HWIO", "NCHW"))

    def bn(x, g, b):
        mean = jnp.mean(x, axis=(0, 2, 3), keepdims=True)
        var = jnp.mean((x - mean) ** 2, axis=(0, 2, 3), keepdims=True)
        return ((x - mean) * lax.rsqrt(var + EPS)
                * g.reshape(1, -1, 1, 1) + b.reshape(1, -1, 1, 1))

    h = jax.nn.sigmoid(bn(conv(x_nchw, w1), g1, b1))
    return jax.nn.sigmoid(bn(conv(h, w2), g2, b2))


if __name__ == "__main__":
    N, Cin, Cout, H, W = 2, 4, 8, 16, 16

    key = jax.random.PRNGKey(0)
    kx, kw1, kw2 = jax.random.split(key, 3)
    x = jax.random.normal(kx, (N, Cin, H, W), dtype=jnp.float32)
    w1 = jax.random.normal(kw1, (3, 3, Cin, Cout), dtype=jnp.float32) * 0.2       # HWIO
    w2 = jax.random.normal(kw2, (3, 3, Cout, Cout), dtype=jnp.float32) * 0.2
    g1 = jnp.ones((Cout,), jnp.float32)    # torch BatchNorm2d defaults: gamma=1, beta=0
    b1 = jnp.zeros((Cout,), jnp.float32)
    g2 = jnp.ones((Cout,), jnp.float32)
    b2 = jnp.zeros((Cout,), jnp.float32)

    ref = jax.block_until_ready(reference_forward(x, w1, g1, b1, w2, g2, b2))

    # f32 MXU-operand path: strict check.
    out = jax.block_until_ready(upsampling_block(x, w1, g1, b1, w2, g2, b2))
    assert out.shape == (N, Cout, H, W), out.shape
    err = float(jnp.max(jnp.abs(out - ref)))
    assert jnp.allclose(out, ref, rtol=1e-4, atol=1e-4), f"f32 path max abs err {err}"

    # bf16 MXU-operand path (the v6e/v7x production setting); BN/sigmoid stay f32. Loose check.
    out_bf16 = jax.block_until_ready(
        upsampling_block(x, w1, g1, b1, w2, g2, b2, matmul_dtype=jnp.bfloat16))
    err_bf16 = float(jnp.max(jnp.abs(out_bf16 - ref)))
    assert jnp.allclose(out_bf16, ref, rtol=0.0, atol=5e-2), f"bf16 path max abs err {err_bf16}"

    print("KERNEL_OK")
</pallas_src>

<mosaic_0001>
module attributes {stable_mosaic.version = 11 : i64} {
  func.func @kernel(%arg0: memref<32x64xf32, #tpu.memory_space<vmem>>, %arg1: memref<3x64x128xf32, #tpu.memory_space<vmem>>, %arg2: memref<384x128xf32, #tpu.memory_space<vmem>>, %arg3: memref<1x128xf32, #tpu.memory_space<vmem>>, %arg4: memref<1x128xf32, #tpu.memory_space<vmem>>, %arg5: memref<1x128xf32, #tpu.memory_space<vmem>>, %arg6: memref<1x128xf32, #tpu.memory_space<vmem>>, %arg7: memref<32x128xf32, #tpu.memory_space<vmem>>) attributes {dimension_semantics = [], scalar_prefetch = 0 : i64, scratch_operands = 0 : i64, tpu.core_type = #tpu.core_type<tc>} {
    %c0 = arith.constant 0 : index
    %c0_0 = arith.constant 0 : index
    %0 = vector.load %arg0[%c0, %c0_0] : memref<32x64xf32, #tpu.memory_space<vmem>>, vector<32x64xf32>
    %1 = tpu.iota {dimensions = array<i32: 0>} : vector<32x64xi32>
    %c16_i32 = arith.constant 16 : i32
    %c0_i32 = arith.constant 0 : i32
    %2 = arith.cmpi eq, %c16_i32, %c0_i32 : i32
    %c1_i32 = arith.constant 1 : i32
    %3 = arith.select %2, %c1_i32, %c16_i32 : i32
    %4 = vector.broadcast %3 : i32 to vector<32x64xi32>
    %5 = arith.remsi %1, %4 : vector<32x64xi32>
    %c0_i32_1 = arith.constant 0 : i32
    %6 = vector.broadcast %c0_i32_1 : i32 to vector<32x64xi32>
    %7 = arith.cmpi ne, %5, %6 : vector<32x64xi32>
    %c0_i32_2 = arith.constant 0 : i32
    %8 = vector.broadcast %c0_i32_2 : i32 to vector<32x64xi32>
    %9 = arith.cmpi slt, %5, %8 : vector<32x64xi32>
    %c0_i32_3 = arith.constant 0 : i32
    %10 = arith.cmpi slt, %3, %c0_i32_3 : i32
    %11 = vector.broadcast %10 : i1 to vector<32x64xi1>
    %12 = vector.broadcast %11 : vector<32x64xi1> to vector<32x64xi1>
    %13 = arith.xori %9, %12 : vector<32x64xi1>
    %14 = arith.andi %13, %7 : vector<32x64xi1>
    %15 = vector.broadcast %3 : i32 to vector<32x64xi32>
    %16 = arith.addi %5, %15 : vector<32x64xi32>
    %17 = arith.select %14, %16, %5 : vector<32x64xi1>, vector<32x64xi32>
    %c0_i32_4 = arith.constant 0 : i32
    %18 = vector.broadcast %c0_i32_4 : i32 to vector<32x64xi32>
    %19 = arith.cmpi eq, %17, %18 : vector<32x64xi32>
    %20 = vector.extract_strided_slice %0 {offsets = [31, 0], sizes = [1, 64], strides = [1, 1]} : vector<32x64xf32> to vector<1x64xf32>
    %21 = vector.extract_strided_slice %0 {offsets = [0, 0], sizes = [31, 64], strides = [1, 1]} : vector<32x64xf32> to vector<31x64xf32>
    %22 = tpu.concatenate %20, %21 in 0 : vector<1x64xf32>, vector<31x64xf32> -> vector<32x64xf32>
    %cst = arith.constant 0.000000e+00 : f32
    %23 = vector.broadcast %cst : f32 to vector<32x64xf32>
    %24 = arith.select %19, %23, %22 : vector<32x64xi1>, vector<32x64xf32>
    %c15_i32 = arith.constant 15 : i32
    %25 = vector.broadcast %c15_i32 : i32 to vector<32x64xi32>
    %26 = arith.cmpi eq, %17, %25 : vector<32x64xi32>
    %27 = vector.extract_strided_slice %0 {offsets = [1, 0], sizes = [31, 64], strides = [1, 1]} : vector<32x64xf32> to vector<31x64xf32>
    %28 = vector.extract_strided_slice %0 {offsets = [0, 0], sizes = [1, 64], strides = [1, 1]} : vector<32x64xf32> to vector<1x64xf32>
    %29 = tpu.concatenate %27, %28 in 0 : vector<31x64xf32>, vector<1x64xf32> -> vector<32x64xf32>
    %cst_5 = arith.constant 0.000000e+00 : f32
    %30 = vector.broadcast %cst_5 : f32 to vector<32x64xf32>
    %31 = arith.select %26, %30, %29 : vector<32x64xi1>, vector<32x64xf32>
    %c0_6 = arith.constant 0 : index
    %c0_7 = arith.constant 0 : index
    %c0_8 = arith.constant 0 : index
    %32 = vector.load %arg1[%c0_6, %c0_7, %c0_8] : memref<3x64x128xf32, #tpu.memory_space<vmem>>, vector<1x64x128xf32>
    %33 = vector.shape_cast %32 : vector<1x64x128xf32> to vector<64x128xf32>
    %cst_9 = arith.constant dense<0.000000e+00> : vector<32x128xf32>
    %34 = tpu.matmul %24, %33, %cst_9 {dimension_numbers = #tpu.dot_dimension_numbers<[1], [0], [0], [1], [0, 0, 1, 1], [], []>} : vector<32x64xf32>, vector<64x128xf32>, vector<32x128xf32> -> vector<32x128xf32>
    %c1 = arith.constant 1 : index
    %c0_10 = arith.constant 0 : index
    %c0_11 = arith.constant 0 : index
    %35 = vector.load %arg1[%c1, %c0_10, %c0_11] : memref<3x64x128xf32, #tpu.memory_space<vmem>>, vector<1x64x128xf32>
    %36 = vector.shape_cast %35 : vector<1x64x128xf32> to vector<64x128xf32>
    %cst_12 = arith.constant dense<0.000000e+00> : vector<32x128xf32>
    %37 = tpu.matmul %0, %36, %cst_12 {dimension_numbers = #tpu.dot_dimension_numbers<[1], [0], [0], [1], [0, 0, 1, 1], [], []>} : vector<32x64xf32>, vector<64x128xf32>, vector<32x128xf32> -> vector<32x128xf32>
    %38 = arith.addf %34, %37 : vector<32x128xf32>
    %c2 = arith.constant 2 : index
    %c0_13 = arith.constant 0 : index
    %c0_14 = arith.constant 0 : index
    %39 = vector.load %arg1[%c2, %c0_13, %c0_14] : memref<3x64x128xf32, #tpu.memory_space<vmem>>, vector<1x64x128xf32>
    %40 = vector.shape_cast %39 : vector<1x64x128xf32> to vector<64x128xf32>
    %cst_15 = arith.constant dense<0.000000e+00> : vector<32x128xf32>
    %41 = tpu.matmul %31, %40, %cst_15 {dimension_numbers = #tpu.dot_dimension_numbers<[1], [0], [0], [1], [0, 0, 1, 1], [], []>} : vector<32x64xf32>, vector<64x128xf32>, vector<32x128xf32> -> vector<32x128xf32>
    %42 = arith.addf %38, %41 : vector<32x128xf32>
    %c0_16 = arith.constant 0 : index
    %c0_17 = arith.constant 0 : index
    %43 = vector.load %arg3[%c0_16, %c0_17] : memref<1x128xf32, #tpu.memory_space<vmem>>, vector<1x128xf32>
    %c0_18 = arith.constant 0 : index
    %c0_19 = arith.constant 0 : index
    %44 = vector.load %arg4[%c0_18, %c0_19] : memref<1x128xf32, #tpu.memory_space<vmem>>, vector<1x128xf32>
    %cst_20 = arith.constant dense<0.000000e+00> : vector<128xf32>
    %45 = vector.multi_reduction <add>, %42, %cst_20 [0] : vector<32x128xf32> to vector<128xf32>
    %46 = vector.shape_cast %45 : vector<128xf32> to vector<1x128xf32>
    %c8_i32 = arith.constant 8 : i32
    %47 = tpu.dynamic_rotate %46 by %c8_i32 dim 1 : vector<1x128xf32>, i32 -> vector<1x128xf32>
    %48 = arith.addf %46, %47 : vector<1x128xf32>
    %c16_i32_21 = arith.constant 16 : i32
    %49 = tpu.dynamic_rotate %48 by %c16_i32_21 dim 1 : vector<1x128xf32>, i32 -> vector<1x128xf32>
    %50 = arith.addf %48, %49 : vector<1x128xf32>
    %c32_i32 = arith.constant 32 : i32
    %51 = tpu.dynamic_rotate %50 by %c32_i32 dim 1 : vector<1x128xf32>, i32 -> vector<1x128xf32>
    %52 = arith.addf %50, %51 : vector<1x128xf32>
    %c64_i32 = arith.constant 64 : i32
    %53 = tpu.dynamic_rotate %52 by %c64_i32 dim 1 : vector<1x128xf32>, i32 -> vector<1x128xf32>
    %54 = arith.addf %52, %53 : vector<1x128xf32>
    %cst_22 = arith.constant 0.001953125 : f32
    %55 = vector.broadcast %cst_22 : f32 to vector<1x128xf32>
    %56 = arith.mulf %54, %55 : vector<1x128xf32>
    %57 = vector.broadcast %56 : vector<1x128xf32> to vector<32x128xf32>
    %58 = arith.subf %42, %57 : vector<32x128xf32>
    %59 = arith.mulf %58, %58 : vector<32x128xf32>
    %cst_23 = arith.constant dense<0.000000e+00> : vector<128xf32>
    %60 = vector.multi_reduction <add>, %59, %cst_23 [0] : vector<32x128xf32> to vector<128xf32>
    %61 = vector.shape_cast %60 : vector<128xf32> to vector<1x128xf32>
    %c8_i32_24 = arith.constant 8 : i32
    %62 = tpu.dynamic_rotate %61 by %c8_i32_24 dim 1 : vector<1x128xf32>, i32 -> vector<1x128xf32>
    %63 = arith.addf %61, %62 : vector<1x128xf32>
    %c16_i32_25 = arith.constant 16 : i32
    %64 = tpu.dynamic_rotate %63 by %c16_i32_25 dim 1 : vector<1x128xf32>, i32 -> vector<1x128xf32>
    %65 = arith.addf %63, %64 : vector<1x128xf32>
    %c32_i32_26 = arith.constant 32 : i32
    %66 = tpu.dynamic_rotate %65 by %c32_i32_26 dim 1 : vector<1x128xf32>, i32 -> vector<1x128xf32>
    %67 = arith.addf %65, %66 : vector<1x128xf32>
    %c64_i32_27 = arith.constant 64 : i32
    %68 = tpu.dynamic_rotate %67 by %c64_i32_27 dim 1 : vector<1x128xf32>, i32 -> vector<1x128xf32>
    %69 = arith.addf %67, %68 : vector<1x128xf32>
    %cst_28 = arith.constant 0.001953125 : f32
    %70 = vector.broadcast %cst_28 : f32 to vector<1x128xf32>
    %71 = arith.mulf %69, %70 : vector<1x128xf32>
    %cst_29 = arith.constant 9.99999974E-6 : f32
    %72 = vector.broadcast %cst_29 : f32 to vector<1x128xf32>
    %73 = arith.addf %71, %72 : vector<1x128xf32>
    %74 = math.rsqrt %73 : vector<1x128xf32>
    %75 = arith.mulf %43, %74 : vector<1x128xf32>
    %76 = vector.broadcast %75 : vector<1x128xf32> to vector<32x128xf32>
    %77 = arith.mulf %58, %76 : vector<32x128xf32>
    %78 = vector.broadcast %44 : vector<1x128xf32> to vector<32x128xf32>
    %79 = arith.addf %77, %78 : vector<32x128xf32>
    %80 = arith.negf %79 : vector<32x128xf32>
    %81 = math.exp %80 : vector<32x128xf32>
    %cst_30 = arith.constant 1.000000e+00 : f32
    %82 = vector.broadcast %cst_30 : f32 to vector<32x128xf32>
    %83 = arith.addf %82, %81 : vector<32x128xf32>
    %84 = arith.divf %82, %83 : vector<32x128xf32>
    %85 = tpu.iota {dimensions = array<i32: 0>} : vector<32x128xi32>
    %c16_i32_31 = arith.constant 16 : i32
    %c0_i32_32 = arith.constant 0 : i32
    %86 = arith.cmpi eq, %c16_i32_31, %c0_i32_32 : i32
    %c1_i32_33 = arith.constant 1 : i32
    %87 = arith.select %86, %c1_i32_33, %c16_i32_31 : i32
    %88 = vector.broadcast %87 : i32 to vector<32x128xi32>
    %89 = arith.remsi %85, %88 : vector<32x128xi32>
    %c0_i32_34 = arith.constant 0 : i32
    %90 = vector.broadcast %c0_i32_34 : i32 to vector<32x128xi32>
    %91 = arith.cmpi ne, %89, %90 : vector<32x128xi32>
    %c0_i32_35 = arith.constant 0 : i32
    %92 = vector.broadcast %c0_i32_35 : i32 to vector<32x128xi32>
    %93 = arith.cmpi slt, %89, %92 : vector<32x128xi32>
    %c0_i32_36 = arith.constant 0 : i32
    %94 = arith.cmpi slt, %87, %c0_i32_36 : i32
    %95 = vector.broadcast %94 : i1 to vector<32x128xi1>
    %96 = vector.broadcast %95 : vector<32x128xi1> to vector<32x128xi1>
    %97 = arith.xori %93, %96 : vector<32x128xi1>
    %98 = arith.andi %97, %91 : vector<32x128xi1>
    %99 = vector.broadcast %87 : i32 to vector<32x128xi32>
    %100 = arith.addi %89, %99 : vector<32x128xi32>
    %101 = arith.select %98, %100, %89 : vector<32x128xi1>, vector<32x128xi32>
    %c0_i32_37 = arith.constant 0 : i32
    %102 = vector.broadcast %c0_i32_37 : i32 to vector<32x128xi32>
    %103 = arith.cmpi eq, %101, %102 : vector<32x128xi32>
    %104 = vector.extract_strided_slice %84 {offsets = [31, 0], sizes = [1, 128], strides = [1, 1]} : vector<32x128xf32> to vector<1x128xf32>
    %105 = vector.extract_strided_slice %84 {offsets = [0, 0], sizes = [31, 128], strides = [1, 1]} : vector<32x128xf32> to vector<31x128xf32>
    %106 = tpu.concatenate %104, %105 in 0 : vector<1x128xf32>, vector<31x128xf32> -> vector<32x128xf32>
    %cst_38 = arith.constant 0.000000e+00 : f32
    %107 = vector.broadcast %cst_38 : f32 to vector<32x128xf32>
    %108 = arith.select %103, %107, %106 : vector<32x128xi1>, vector<32x128xf32>
    %c15_i32_39 = arith.constant 15 : i32
    %109 = vector.broadcast %c15_i32_39 : i32 to vector<32x128xi32>
    %110 = arith.cmpi eq, %101, %109 : vector<32x128xi32>
    %111 = vector.extract_strided_slice %84 {offsets = [1, 0], sizes = [31, 128], strides = [1, 1]} : vector<32x128xf32> to vector<31x128xf32>
    %112 = vector.extract_strided_slice %84 {offsets = [0, 0], sizes = [1, 128], strides = [1, 1]} : vector<32x128xf32> to vector<1x128xf32>
    %113 = tpu.concatenate %111, %112 in 0 : vector<31x128xf32>, vector<1x128xf32> -> vector<32x128xf32>
    %cst_40 = arith.constant 0.000000e+00 : f32
    %114 = vector.broadcast %cst_40 : f32 to vector<32x128xf32>
    %115 = arith.select %110, %114, %113 : vector<32x128xi1>, vector<32x128xf32>
    %116 = tpu.concatenate %108, %84, %115 in 1 : vector<32x128xf32>, vector<32x128xf32>, vector<32x128xf32> -> vector<32x384xf32>
    %c0_41 = arith.constant 0 : index
    %c0_42 = arith.constant 0 : index
    %117 = vector.load %arg2[%c0_41, %c0_42] : memref<384x128xf32, #tpu.memory_space<vmem>>, vector<384x128xf32>
    %cst_43 = arith.constant dense<0.000000e+00> : vector<32x128xf32>
    %118 = tpu.matmul %116, %117, %cst_43 {dimension_numbers = #tpu.dot_dimension_numbers<[1], [0], [0], [1], [0, 0, 1, 1], [], []>} : vector<32x384xf32>, vector<384x128xf32>, vector<32x128xf32> -> vector<32x128xf32>
    %c0_44 = arith.constant 0 : index
    %c0_45 = arith.constant 0 : index
    %119 = vector.load %arg5[%c0_44, %c0_45] : memref<1x128xf32, #tpu.memory_space<vmem>>, vector<1x128xf32>
    %c0_46 = arith.constant 0 : index
    %c0_47 = arith.constant 0 : index
    %120 = vector.load %arg6[%c0_46, %c0_47] : memref<1x128xf32, #tpu.memory_space<vmem>>, vector<1x128xf32>
    %cst_48 = arith.constant dense<0.000000e+00> : vector<128xf32>
    %121 = vector.multi_reduction <add>, %118, %cst_48 [0] : vector<32x128xf32> to vector<128xf32>
    %122 = vector.shape_cast %121 : vector<128xf32> to vector<1x128xf32>
    %c8_i32_49 = arith.constant 8 : i32
    %123 = tpu.dynamic_rotate %122 by %c8_i32_49 dim 1 : vector<1x128xf32>, i32 -> vector<1x128xf32>
    %124 = arith.addf %122, %123 : vector<1x128xf32>
    %c16_i32_50 = arith.constant 16 : i32
    %125 = tpu.dynamic_rotate %124 by %c16_i32_50 dim 1 : vector<1x128xf32>, i32 -> vector<1x128xf32>
    %126 = arith.addf %124, %125 : vector<1x128xf32>
    %c32_i32_51 = arith.constant 32 : i32
    %127 = tpu.dynamic_rotate %126 by %c32_i32_51 dim 1 : vector<1x128xf32>, i32 -> vector<1x128xf32>
    %128 = arith.addf %126, %127 : vector<1x128xf32>
    %c64_i32_52 = arith.constant 64 : i32
    %129 = tpu.dynamic_rotate %128 by %c64_i32_52 dim 1 : vector<1x128xf32>, i32 -> vector<1x128xf32>
    %130 = arith.addf %128, %129 : vector<1x128xf32>
    %cst_53 = arith.constant 0.001953125 : f32
    %131 = vector.broadcast %cst_53 : f32 to vector<1x128xf32>
    %132 = arith.mulf %130, %131 : vector<1x128xf32>
    %133 = vector.broadcast %132 : vector<1x128xf32> to vector<32x128xf32>
    %134 = arith.subf %118, %133 : vector<32x128xf32>
    %135 = arith.mulf %134, %134 : vector<32x128xf32>
    %cst_54 = arith.constant dense<0.000000e+00> : vector<128xf32>
    %136 = vector.multi_reduction <add>, %135, %cst_54 [0] : vector<32x128xf32> to vector<128xf32>
    %137 = vector.shape_cast %136 : vector<128xf32> to vector<1x128xf32>
    %c8_i32_55 = arith.constant 8 : i32
    %138 = tpu.dynamic_rotate %137 by %c8_i32_55 dim 1 : vector<1x128xf32>, i32 -> vector<1x128xf32>
    %139 = arith.addf %137, %138 : vector<1x128xf32>
    %c16_i32_56 = arith.constant 16 : i32
    %140 = tpu.dynamic_rotate %139 by %c16_i32_56 dim 1 : vector<1x128xf32>, i32 -> vector<1x128xf32>
    %141 = arith.addf %139, %140 : vector<1x128xf32>
    %c32_i32_57 = arith.constant 32 : i32
    %142 = tpu.dynamic_rotate %141 by %c32_i32_57 dim 1 : vector<1x128xf32>, i32 -> vector<1x128xf32>
    %143 = arith.addf %141, %142 : vector<1x128xf32>
    %c64_i32_58 = arith.constant 64 : i32
    %144 = tpu.dynamic_rotate %143 by %c64_i32_58 dim 1 : vector<1x128xf32>, i32 -> vector<1x128xf32>
    %145 = arith.addf %143, %144 : vector<1x128xf32>
    %cst_59 = arith.constant 0.001953125 : f32
    %146 = vector.broadcast %cst_59 : f32 to vector<1x128xf32>
    %147 = arith.mulf %145, %146 : vector<1x128xf32>
    %cst_60 = arith.constant 9.99999974E-6 : f32
    %148 = vector.broadcast %cst_60 : f32 to vector<1x128xf32>
    %149 = arith.addf %147, %148 : vector<1x128xf32>
    %150 = math.rsqrt %149 : vector<1x128xf32>
    %151 = arith.mulf %119, %150 : vector<1x128xf32>
    %152 = vector.broadcast %151 : vector<1x128xf32> to vector<32x128xf32>
    %153 = arith.mulf %134, %152 : vector<32x128xf32>
    %154 = vector.broadcast %120 : vector<1x128xf32> to vector<32x128xf32>
    %155 = arith.addf %153, %154 : vector<32x128xf32>
    %156 = arith.negf %155 : vector<32x128xf32>
    %157 = math.exp %156 : vector<32x128xf32>
    %cst_61 = arith.constant 1.000000e+00 : f32
    %158 = vector.broadcast %cst_61 : f32 to vector<32x128xf32>
    %159 = arith.addf %158, %157 : vector<32x128xf32>
    %160 = arith.divf %158, %159 : vector<32x128xf32>
    %c0_62 = arith.constant 0 : index
    %c0_63 = arith.constant 0 : index
    %161 = vector.load %arg7[%c0_62, %c0_63] : memref<32x128xf32, #tpu.memory_space<vmem>>, vector<32x128xf32>
    tpu.vector_store %arg7[%c0_62, %c0_63], %160 {strides = array<i32>} : memref<32x128xf32, #tpu.memory_space<vmem>>, vector<32x128xf32>,
    return
  }
}

</mosaic_0001>

<llo_original>
// kernel: tpu_custom_call.1
$region0: #{tpu_custom_call.1}
  #allocation0 [shape = 'u32[]', space=smem, size = 0x4, offset = 0x4, fixed_abs, tag = 'smem constant byte address 0x4 - core index']
  #allocation1 [shape = 'u32[72,128]{1,0:T(1,128)}', space=vmem, size = 0x9000, scoped, tag = 'internal scratch']
  %s0 = inlined_call_operand.hbm [shape: f32[32,64], index: 0, kind: input, shape index: {}]
  %s1 = inlined_call_operand.hbm [shape: f32[3,64,128], index: 1, kind: input, shape index: {}]
  %s2 = inlined_call_operand.hbm [shape: f32[384,128], index: 2, kind: input, shape index: {}]
  %s3 = inlined_call_operand.vmem [shape: f32[1,128], index: 3, kind: input, shape index: {}]
  %s4 = inlined_call_operand.vmem [shape: f32[1,128], index: 4, kind: input, shape index: {}]
  %s5 = inlined_call_operand.vmem [shape: f32[1,128], index: 5, kind: input, shape index: {}]
  %s6 = inlined_call_operand.vmem [shape: f32[1,128], index: 6, kind: input, shape index: {}]
  %s7 = inlined_call_operand.hbm [shape: f32[32,128], index: 7, kind: output, shape index: {}]
  %s8 = sld [smem:[#allocation0]]
  $region50: #{tpu_custom_call.1} parent=0
    _
  %s10 = ssub.s32 1, %s8
  %s11 = scalar_select 0, %s10, %s8
  $region1: #{tpu_custom_call.1} parent=0
    #allocation2 [shape = 'u8[16384]{0}', space=vmem, size = 0x4000, scoped, tag = 'input window, operand 0, single buffered']
    #allocation3 [shape = 's32[1]{0}', space=sflag, size = 0x4, scoped, tag = 'scoped memory for tpu_custom_call.1']
    #allocation4 [shape = 's32[1]{0}', space=sflag, size = 0x4, scoped, tag = 'scoped memory for tpu_custom_call.1']
    #allocation5 [shape = 'u8[98304]{0}', space=vmem, size = 0x18000, scoped, tag = 'input window, operand 1, single buffered']
    #allocation6 [shape = 's32[1]{0}', space=sflag, size = 0x4, scoped, tag = 'scoped memory for tpu_custom_call.1']
    #allocation7 [shape = 'u8[196608]{0}', space=vmem, size = 0x30000, scoped, tag = 'input window, operand 2, single buffered']
    #allocation8 [shape = 'u8[16384]{0}', space=vmem, size = 0x4000, scoped, tag = 'output window, operand 0, single buffered']
    %12 = vsyncpa [#allocation3], 0
    %13 = vsyncpa [#allocation6], 0
    %14 = vsyncpa [#allocation4], 0
    // Predicated region
    $region2: #{tpu_custom_call.1} parent=1 // pred_check
      _
    $region3: #{tpu_custom_call.1} parent=1 // pred_check_branch
      %16 = sbr.rel (0) target = $region5
    $region4: #{tpu_custom_call.1} parent=1 // pred_region
      %18 = vsyncadd [#allocation3], 0
      %s19 = sshll.u32 %s0, 4
      %s20 = int_to_ptr.hbm [resolvable:$true] %s19
      %s21 = sshll.u32 [#allocation2], 4
      %s22 = int_to_ptr.vmem [resolvable:$true] %s21
      %27 = dma.hbm_to_vmem [thread:$0]  %s20, 512, %s22, [#allocation3], 128, 128, 8
    $region5: #{tpu_custom_call.1} parent=1 // pred_fallthru
      _
    // Predicated region
    $region6: #{tpu_custom_call.1} parent=1 // pred_check
      _
    $region7: #{tpu_custom_call.1} parent=1 // pred_check_branch
      %29 = sbr.rel (0) target = $region9
    $region8: #{tpu_custom_call.1} parent=1 // pred_region
      %31 = vsyncadd [#allocation6], 0
      %s32 = sshll.u32 %s1, 4
      %s33 = int_to_ptr.hbm [resolvable:$true] %s32
      %s34 = sshll.u32 [#allocation5], 4
      %s35 = int_to_ptr.vmem [resolvable:$true] %s34
      %40 = dma.hbm_to_vmem [thread:$0]  %s33, 3072, %s35, [#allocation6], 128, 128, 8
    $region9: #{tpu_custom_call.1} parent=1 // pred_fallthru
      _
    // Predicated region
    $region10: #{tpu_custom_call.1} parent=1 // pred_check
      _
    $region11: #{tpu_custom_call.1} parent=1 // pred_check_branch
      %42 = sbr.rel (0) target = $region13
    $region12: #{tpu_custom_call.1} parent=1 // pred_region
      %44 = vsyncadd [#allocation6], 0
      %s45 = sshll.u32 %s2, 4
      %s46 = int_to_ptr.hbm [resolvable:$true] %s45
      %s47 = sshll.u32 [#allocation7], 4
      %s48 = int_to_ptr.vmem [resolvable:$true] %s47
      %53 = dma.hbm_to_vmem [thread:$0]  %s46, 6144, %s48, [#allocation6], 128, 128, 8
    $region13: #{tpu_custom_call.1} parent=1 // pred_fallthru
      _
    // Predicated region
    $region14: #{tpu_custom_call.1} parent=1 // pred_check
      _
    $region15: #{tpu_custom_call.1} parent=1 // pred_check_branch
      %55 = sbr.rel (0) target = $region17
    $region16: #{tpu_custom_call.1} parent=1 // pred_region
      _
    $region17: #{tpu_custom_call.1} parent=1 // pred_fallthru
      _
    // Predicated region
    $region18: #{tpu_custom_call.1} parent=1 // pred_check
      _
    $region19: #{tpu_custom_call.1} parent=1 // pred_check_branch
      %57 = sbr.rel (0) target = $region21
    $region20: #{tpu_custom_call.1} parent=1 // pred_region
      _
    $region21: #{tpu_custom_call.1} parent=1 // pred_fallthru
      _
    // Predicated region
    $region22: #{tpu_custom_call.1} parent=1 // pred_check
      _
    $region23: #{tpu_custom_call.1} parent=1 // pred_check_branch
      %59 = sbr.rel (0) target = $region25
    $region24: #{tpu_custom_call.1} parent=1 // pred_region
      _
    $region25: #{tpu_custom_call.1} parent=1 // pred_fallthru
      _
    // Predicated region
    $region26: #{tpu_custom_call.1} parent=1 // pred_check
      _
    $region27: #{tpu_custom_call.1} parent=1 // pred_check_branch
      %61 = sbr.rel (0) target = $region29
    $region28: #{tpu_custom_call.1} parent=1 // pred_region
      _
    $region29: #{tpu_custom_call.1} parent=1 // pred_fallthru
      _
    // Predicated region
    $region30: #{tpu_custom_call.1} parent=1 // pred_check
      _
    $region31: #{tpu_custom_call.1} parent=1 // pred_check_branch
      %63 = sbr.rel (0) target = $region33
    $region32: #{tpu_custom_call.1} parent=1 // pred_region
      %65 = dma.done [#allocation3], 512
    $region33: #{tpu_custom_call.1} parent=1 // pred_fallthru
      _
    // Predicated region
    $region34: #{tpu_custom_call.1} parent=1 // pred_check
      _
    $region35: #{tpu_custom_call.1} parent=1 // pred_check_branch
      %67 = sbr.rel (0) target = $region37
    $region36: #{tpu_custom_call.1} parent=1 // pred_region
      %69 = dma.done [#allocation6], 3072
    $region37: #{tpu_custom_call.1} parent=1 // pred_fallthru
      _
    // Predicated region
    $region38: #{tpu_custom_call.1} parent=1 // pred_check
      _
    $region39: #{tpu_custom_call.1} parent=1 // pred_check_branch
      %71 = sbr.rel (0) target = $region41
    $region40: #{tpu_custom_call.1} parent=1 // pred_region
      %73 = dma.done [#allocation6], 6144
    $region41: #{tpu_custom_call.1} parent=1 // pred_fallthru
      _
    %v74 = vld [vmem:[#allocation2] sm:$0xff]
    %v75 = vld [vmem:[#allocation2 + $0x8] sm:$0xff]
    %v76 = vld [vmem:[#allocation2 + $0x10] sm:$0xff]
    %v77 = vld [vmem:[#allocation2 + $0x18] sm:$0xff]
    %v78 = vlaneseq
    %v79 = vshrl.u32 %v78, 7
    %v80 = vadd.s32 %v79, 8
    %v81 = vadd.s32 %v79, 16
    %v82 = vadd.s32 %v79, 24
    %vm83 = vcmp.lt.s32.totalorder %v79, 0
    %v84 = vsub.s32 0, %v79
    %v85 = vsel %vm83, %v84, %v79
    %v86 = vshrl.u32 %v85, 4
    %v87 = vand.u32 %v85, 15
    %v88 = vsub.s32 0, %v87
    %v89 = vsel %vm83, %v88, %v87
    %vm90 = vcmp.lt.s32.totalorder %v80, 0
    %v91 = vsub.s32 0, %v80
    %v92 = vsel %vm90, %v91, %v80
    %v93 = vshrl.u32 %v92, 4
    %v94 = vand.u32 %v92, 15
    %v95 = vsub.s32 0, %v94
    %v96 = vsel %vm90, %v95, %v94
    %vm97 = vcmp.lt.s32.totalorder %v81, 0
    %v98 = vsub.s32 0, %v81
    %v99 = vsel %vm97, %v98, %v81
    %v100 = vshrl.u32 %v99, 4
    %v101 = vand.u32 %v99, 15
    %v102 = vsub.s32 0, %v101
    %v103 = vsel %vm97, %v102, %v101
    %vm104 = vcmp.lt.s32.totalorder %v82, 0
    %v105 = vsub.s32 0, %v82
    %v106 = vsel %vm104, %v105, %v82
    %v107 = vshrl.u32 %v106, 4
    %v108 = vand.u32 %v106, 15
    %v109 = vsub.s32 0, %v108
    %v110 = vsel %vm104, %v109, %v108
    %vm111 = vcmp.ne.s32.totalorder %v89, 0
    %vm112 = vcmp.ne.s32.totalorder %v96, 0
    %vm113 = vcmp.ne.s32.totalorder %v103, 0
    %vm114 = vcmp.ne.s32.totalorder %v110, 0
    %vm115 = vcmp.lt.s32.totalorder %v89, 0
    %vm116 = vcmp.lt.s32.totalorder %v96, 0
    %vm117 = vcmp.lt.s32.totalorder %v103, 0
    %vm118 = vcmp.lt.s32.totalorder %v110, 0
    %vm119 = vmand %vm115, %vm111
    %vm120 = vmand %vm116, %vm112
    %vm121 = vmand %vm117, %vm113
    %vm122 = vmand %vm118, %vm114
    %v123 = vadd.s32 %v89, 16
    %v124 = vadd.s32 %v96, 16
    %v125 = vadd.s32 %v103, 16
    %v126 = vadd.s32 %v110, 16
    %v127 = vsel %vm119, %v123, %v89
    %v128 = vsel %vm120, %v124, %v96
    %v129 = vsel %vm121, %v125, %v103
    %v130 = vsel %vm122, %v126, %v110
    %vm131 = vcmp.eq.s32.totalorder %v127, 0
    %vm132 = vcmp.eq.s32.totalorder %v128, 0
    %vm133 = vcmp.eq.s32.totalorder %v129, 0
    %vm134 = vcmp.eq.s32.totalorder %v130, 0
    %v136 = vrot.slane %v77, 7
    %vm141 = vcmask 1040384
    %v142 = vrot.slane %v74, 7
    %v143 = vrot.slane %v75, 7
    %v144 = vsel %vm141, %v142, %v143
    %v145 = vrot.slane %v76, 7
    %v146 = vsel %vm141, %v143, %v145
    %v147 = vsel %vm141, %v145, %v136
    %v152 = vsel %vm141, %v136, %v142
    %v153 = vsel %vm131, 0.0, %v152
    %v154 = vsel %vm132, 0.0, %v144
    %v155 = vsel %vm133, 0.0, %v146
    %v156 = vsel %vm134, 0.0, %v147
    %vm157 = vcmp.eq.s32.totalorder %v127, 15
    %vm158 = vcmp.eq.s32.totalorder %v128, 15
    %vm159 = vcmp.eq.s32.totalorder %v129, 15
    %vm160 = vcmp.eq.s32.totalorder %v130, 15
    %vm161 = vcmask 1046528
    %v162 = vrot.slane %v74, 1
    %v163 = vrot.slane %v75, 1
    %v164 = vsel %vm161, %v162, %v163
    %v165 = vrot.slane %v76, 1
    %v166 = vsel %vm161, %v163, %v165
    %v167 = vrot.slane %v77, 1
    %v168 = vsel %vm161, %v165, %v167
    %v174 = vsel %vm161, %v167, %v162
    %v175 = vsel %vm157, 0.0, %v164
    %v176 = vsel %vm158, 0.0, %v166
    %v177 = vsel %vm159, 0.0, %v168
    %v178 = vsel %vm160, 0.0, %v174
    %v179 = vld [vmem:[#allocation5] sm:$0xff]
    %v180 = vld [vmem:[#allocation5 + $0x8] sm:$0xff]
    %v181 = vld [vmem:[#allocation5 + $0x10] sm:$0xff]
    %v182 = vld [vmem:[#allocation5 + $0x18] sm:$0xff]
    %v183 = vld [vmem:[#allocation5 + $0x20] sm:$0xff]
    %v184 = vld [vmem:[#allocation5 + $0x28] sm:$0xff]
    %v185 = vld [vmem:[#allocation5 + $0x30] sm:$0xff]
    %v186 = vld [vmem:[#allocation5 + $0x38] sm:$0xff]
    %s187 = scalar_lea.vmem [#allocation5], 64
    %v188 = vld [vmem:[%s187] sm:$0xff]
    %v189 = vld [vmem:[%s187 + $0x8] sm:$0xff]
    %v190 = vld [vmem:[%s187 + $0x10] sm:$0xff]
    %v191 = vld [vmem:[%s187 + $0x18] sm:$0xff]
    %v192 = vld [vmem:[%s187 + $0x20] sm:$0xff]
    %v193 = vld [vmem:[%s187 + $0x28] sm:$0xff]
    %v194 = vld [vmem:[%s187 + $0x30] sm:$0xff]
    %v195 = vld [vmem:[%s187 + $0x38] sm:$0xff]
    %vm196 = vcmask 523264
    %v197 = vsel %vm196, %v74, 0
    %v199 = vsel %vm196, %v75, 0
    %v201 = vsel %vm196, %v76, 0
    %v203 = vsel %vm196, %v77, 0
    %205 = vmatpush.msra.mxu0 0.0
    %206 = vmatpush.msra.mxu0 0.0
    %207 = vmatpush.msra.mxu0 0.0
    %208 = vmatpush.msra.mxu0 0.0
    %209 = vmatpush.msra.mxu0 0.0
    %210 = vmatpush.msra.mxu0 0.0
    %211 = vmatpush.msra.mxu0 0.0
    %212 = vmatpush.msra.mxu0 0.0
    %213 = vmatpush.msra.mxu0 %v195
    %214 = vmatpush.msra.mxu0 %v194
    %215 = vmatpush.msra.mxu0 %v193
    %216 = vmatpush.msra.mxu0 %v192
    %217 = vmatpush.msra.mxu0 %v191
    %218 = vmatpush.msra.mxu0 %v190
    %219 = vmatpush.msra.mxu0 %v189
    %220 = vmatpush.msra.mxu0 %v188
    %221 = vmatmul.f32.gmra.mxu0 %v197
    %v222 = vpop.f32.mrf.mxu0
    %v223 = vadd.f32 0.0, %v222
    %224 = vmatmul.f32.gmra.mxu0 %v199
    %v225 = vpop.f32.mrf.mxu0
    %v226 = vadd.f32 0.0, %v225
    %227 = vmatmul.f32.gmra.mxu0 %v201
    %v228 = vpop.f32.mrf.mxu0
    %v229 = vadd.f32 0.0, %v228
    %230 = vmatmul.f32.gmra.mxu0 %v203
    %v231 = vpop.f32.mrf.mxu0
    %v232 = vadd.f32 0.0, %v231
    %233 = vdwg.mxu0
    %v235 = vsel %vm196, %v153, 0
    %v238 = vsel %vm196, %v154, 0
    %v241 = vsel %vm196, %v155, 0
    %v244 = vsel %vm196, %v156, 0
    %246 = vmatpush.msra.mxu0 0.0
    %247 = vmatpush.msra.mxu0 0.0
    %248 = vmatpush.msra.mxu0 0.0
    %249 = vmatpush.msra.mxu0 0.0
    %250 = vmatpush.msra.mxu0 0.0
    %251 = vmatpush.msra.mxu0 0.0
    %252 = vmatpush.msra.mxu0 0.0
    %253 = vmatpush.msra.mxu0 0.0
    %254 = vmatpush.msra.mxu0 %v186
    %255 = vmatpush.msra.mxu0 %v185
    %256 = vmatpush.msra.mxu0 %v184
    %257 = vmatpush.msra.mxu0 %v183
    %258 = vmatpush.msra.mxu0 %v182
    %259 = vmatpush.msra.mxu0 %v181
    %260 = vmatpush.msra.mxu0 %v180
    %261 = vmatpush.msra.mxu0 %v179
    %262 = vmatmul.f32.gmra.mxu0 %v235
    %v263 = vpop.f32.mrf.mxu0
    %v264 = vadd.f32 %v223, %v263
    %265 = vmatmul.f32.gmra.mxu0 %v238
    %v266 = vpop.f32.mrf.mxu0
    %v267 = vadd.f32 %v226, %v266
    %268 = vmatmul.f32.gmra.mxu0 %v241
    %v269 = vpop.f32.mrf.mxu0
    %v270 = vadd.f32 %v229, %v269
    %271 = vmatmul.f32.gmra.mxu0 %v244
    %v272 = vpop.f32.mrf.mxu0
    %v273 = vadd.f32 %v232, %v272
    %274 = vdwg.mxu0
    %s275 = scalar_lea.vmem [#allocation5], 128
    %v276 = vld [vmem:[%s275] sm:$0xff]
    %v277 = vld [vmem:[%s275 + $0x8] sm:$0xff]
    %v278 = vld [vmem:[%s275 + $0x10] sm:$0xff]
    %v279 = vld [vmem:[%s275 + $0x18] sm:$0xff]
    %v280 = vld [vmem:[%s275 + $0x20] sm:$0xff]
    %v281 = vld [vmem:[%s275 + $0x28] sm:$0xff]
    %v282 = vld [vmem:[%s275 + $0x30] sm:$0xff]
    %v283 = vld [vmem:[%s275 + $0x38] sm:$0xff]
    %v285 = vsel %vm196, %v175, 0
    %v288 = vsel %vm196, %v176, 0
    %v291 = vsel %vm196, %v177, 0
    %v294 = vsel %vm196, %v178, 0
    %296 = vmatpush.msra.mxu0 0.0
    %297 = vmatpush.msra.mxu0 0.0
    %298 = vmatpush.msra.mxu0 0.0
    %299 = vmatpush.msra.mxu0 0.0
    %300 = vmatpush.msra.mxu0 0.0
    %301 = vmatpush.msra.mxu0 0.0
    %302 = vmatpush.msra.mxu0 0.0
    %303 = vmatpush.msra.mxu0 0.0
    %304 = vmatpush.msra.mxu0 %v283
    %305 = vmatpush.msra.mxu0 %v282
    %306 = vmatpush.msra.mxu0 %v281
    %307 = vmatpush.msra.mxu0 %v280
    %308 = vmatpush.msra.mxu0 %v279
    %309 = vmatpush.msra.mxu0 %v278
    %310 = vmatpush.msra.mxu0 %v277
    %311 = vmatpush.msra.mxu0 %v276
    %312 = vmatmul.f32.gmra.mxu0 %v285
    %v313 = vpop.f32.mrf.mxu0
    %v314 = vadd.f32 0.0, %v313
    %315 = vmatmul.f32.gmra.mxu0 %v288
    %v316 = vpop.f32.mrf.mxu0
    %v317 = vadd.f32 0.0, %v316
    %318 = vmatmul.f32.gmra.mxu0 %v291
    %v319 = vpop.f32.mrf.mxu0
    %v320 = vadd.f32 0.0, %v319
    %321 = vmatmul.f32.gmra.mxu0 %v294
    %v322 = vpop.f32.mrf.mxu0
    %v323 = vadd.f32 0.0, %v322
    %324 = vdwg.mxu0
    %v325 = vadd.f32 %v264, %v314
    %v326 = vadd.f32 %v267, %v317
    %v327 = vadd.f32 %v270, %v320
    %v328 = vadd.f32 %v273, %v323
    %v329 = vld [vmem:[%s3] sm:$0x1]
    %v330 = vld [vmem:[%s4] sm:$0x1]
    %v331 = vadd.f32 %v325, %v326
    %v332 = vadd.f32 %v331, %v327
    %v333 = vadd.f32 %v332, %v328
    %v334 = vrot.slane %v333, 4
    %v335 = vadd.f32 %v333, %v334
    %v336 = vrot.slane %v335, 2
    %v337 = vadd.f32 %v335, %v336
    %v338 = vrot.slane %v337, 1
    %v339 = vadd.f32 %v337, %v338
    %340 = vrot.lane.b32.xlu0 %v339, 8
    %v341 = vpop.permute.xlu0 %340
    %v342 = vadd.f32 %v339, %v341
    %343 = vrot.lane.b32.xlu0 %v342, 16
    %v344 = vpop.permute.xlu0 %343
    %v345 = vadd.f32 %v342, %v344
    %346 = vrot.lane.b32.xlu0 %v345, 32
    %v347 = vpop.permute.xlu0 %346
    %v348 = vadd.f32 %v345, %v347
    %349 = vrot.lane.b32.xlu0 %v348, 64
    %v350 = vpop.permute.xlu0 %349
    %v351 = vadd.f32 %v348, %v350
    %v352 = vmul.f32 %v351, 0.001953125
    %v353 = vperm.slane %v352, 0
    %v354 = vsub.f32 %v325, %v353
    %v355 = vsub.f32 %v326, %v353
    %v356 = vsub.f32 %v327, %v353
    %v357 = vsub.f32 %v328, %v353
    %v358 = vmul.f32 %v354, %v354
    %v359 = vmul.f32 %v355, %v355
    %v360 = vmul.f32 %v356, %v356
    %v361 = vmul.f32 %v357, %v357
    %v362 = vadd.f32 %v358, %v359
    %v363 = vadd.f32 %v362, %v360
    %v364 = vadd.f32 %v363, %v361
    %v365 = vrot.slane %v364, 4
    %v366 = vadd.f32 %v364, %v365
    %v367 = vrot.slane %v366, 2
    %v368 = vadd.f32 %v366, %v367
    %v369 = vrot.slane %v368, 1
    %v370 = vadd.f32 %v368, %v369
    %371 = vrot.lane.b32.xlu0 %v370, 8
    %v372 = vpop.permute.xlu0 %371
    %v373 = vadd.f32 %v370, %v372
    %374 = vrot.lane.b32.xlu0 %v373, 16
    %v375 = vpop.permute.xlu0 %374
    %v376 = vadd.f32 %v373, %v375
    %377 = vrot.lane.b32.xlu0 %v376, 32
    %v378 = vpop.permute.xlu0 %377
    %v379 = vadd.f32 %v376, %v378
    %380 = vrot.lane.b32.xlu0 %v379, 64
    %v381 = vpop.permute.xlu0 %380
    %v382 = vadd.f32 %v379, %v381
    %v383 = vmul.f32 %v382, 0.001953125
    %v384 = vadd.f32 %v383, 1e-05
    %v385 = vrsqrt.pop %v384
    %v386 = vmul.f32 %v385, %v384
    %v387 = vmul.f32 %v386, %v385
    %v388 = vmul.f32 0.5, %v387
    %v389 = vsub.f32 1.5, %v388
    %v390 = vmul.f32 %v385, %v389
    %vm391 = vweird.f32 %v384
    %vm392 = vweird.f32 %v385
    %vm393 = vmor %vm391, %vm392
    %v394 = vsel %vm393, %v385, %v390
    %v395 = vmul.f32 %v329, %v394
    %v397 = vperm.slane %v395, 0
    %v399 = vmul.f32 %v354, %v397
    %v400 = vmul.f32 %v355, %v397
    %v401 = vmul.f32 %v356, %v397
    %v402 = vmul.f32 %v357, %v397
    %v404 = vperm.slane %v330, 0
    %v406 = vadd.f32 %v399, %v404
    %v407 = vadd.f32 %v400, %v404
    %v408 = vadd.f32 %v401, %v404
    %v409 = vadd.f32 %v402, %v404
    %v410 = vxor.u32 %v406, 2147483648
    %v411 = vxor.u32 %v407, 2147483648
    %v412 = vxor.u32 %v408, 2147483648
    %v413 = vxor.u32 %v409, 2147483648
    %v414 = vmul.f32 %v410, 1.442695
    %v415 = vpow.pop %v414
    %v416 = vmul.f32 %v411, 1.442695
    %v417 = vpow.pop %v416
    %v418 = vmul.f32 %v412, 1.442695
    %v419 = vpow.pop %v418
    %v420 = vmul.f32 %v413, 1.442695
    %v421 = vpow.pop %v420
    %v422 = vadd.f32 %v415, 1.0
    %v423 = vadd.f32 %v417, 1.0
    %v424 = vadd.f32 %v419, 1.0
    %v425 = vadd.f32 %v421, 1.0
    %v426 = vrcp.pop %v422
    %v427 = vmul.f32 %v422, %v426
    %v428 = vsub.f32 1.0, %v427
    %v429 = vmul.f32 %v426, %v428
    %v430 = vadd.f32 %v426, %v429
    %vm431 = vweird.f32 %v422
    %vm432 = vweird.f32 %v426
    %vm433 = vmor %vm431, %vm432
    %v434 = vsel %vm433, %v426, %v430
    %v435 = vand.u32 2147483647, %v422
    %vm436 = vcmp.eq.f32.partialorder %v435, 8.507059e+37
    %v437 = vand.u32 %v422, 2147483648
    %v438 = vor.u32 1.1754944e-38, %v437
    %v439 = vsel %vm436, %v438, %v434
    %v440 = vmul.f32 1.0, %v439
    %v441 = vrcp.pop %v423
    %v442 = vmul.f32 %v423, %v441
    %v443 = vsub.f32 1.0, %v442
    %v444 = vmul.f32 %v441, %v443
    %v445 = vadd.f32 %v441, %v444
    %vm446 = vweird.f32 %v423
    %vm447 = vweird.f32 %v441
    %vm448 = vmor %vm446, %vm447
    %v449 = vsel %vm448, %v441, %v445
    %v450 = vand.u32 2147483647, %v423
    %vm451 = vcmp.eq.f32.partialorder %v450, 8.507059e+37
    %v452 = vand.u32 %v423, 2147483648
    %v453 = vor.u32 1.1754944e-38, %v452
    %v454 = vsel %vm451, %v453, %v449
    %v455 = vmul.f32 1.0, %v454
    %v456 = vrcp.pop %v424
    %v457 = vmul.f32 %v424, %v456
    %v458 = vsub.f32 1.0, %v457
    %v459 = vmul.f32 %v456, %v458
    %v460 = vadd.f32 %v456, %v459
    %vm461 = vweird.f32 %v424
    %vm462 = vweird.f32 %v456
    %vm463 = vmor %vm461, %vm462
    %v464 = vsel %vm463, %v456, %v460
    %v465 = vand.u32 2147483647, %v424
    %vm466 = vcmp.eq.f32.partialorder %v465, 8.507059e+37
    %v467 = vand.u32 %v424, 2147483648
    %v468 = vor.u32 1.1754944e-38, %v467
    %v469 = vsel %vm466, %v468, %v464
    %v470 = vmul.f32 1.0, %v469
    %v471 = vrcp.pop %v425
    %v472 = vmul.f32 %v425, %v471
    %v473 = vsub.f32 1.0, %v472
    %v474 = vmul.f32 %v471, %v473
    %v475 = vadd.f32 %v471, %v474
    %vm476 = vweird.f32 %v425
    %vm477 = vweird.f32 %v471
    %vm478 = vmor %vm476, %vm477
    %v479 = vsel %vm478, %v471, %v475
    %v480 = vand.u32 2147483647, %v425
    %vm481 = vcmp.eq.f32.partialorder %v480, 8.507059e+37
    %v482 = vand.u32 %v425, 2147483648
    %v483 = vor.u32 1.1754944e-38, %v482
    %v484 = vsel %vm481, %v483, %v479
    %v485 = vmul.f32 1.0, %v484
    %v487 = vrot.slane %v485, 7
    %v492 = vrot.slane %v440, 7
    %v493 = vrot.slane %v455, 7
    %v494 = vsel %vm141, %v492, %v493
    %v495 = vrot.slane %v470, 7
    %v496 = vsel %vm141, %v493, %v495
    %v497 = vsel %vm141, %v495, %v487
    %v502 = vsel %vm141, %v487, %v492
    %v503 = vsel %vm131, 0.0, %v502
    %v504 = vsel %vm132, 0.0, %v494
    %v505 = vsel %vm133, 0.0, %v496
    %v506 = vsel %vm134, 0.0, %v497
    %v507 = vrot.slane %v440, 1
    %v508 = vrot.slane %v455, 1
    %v509 = vsel %vm161, %v507, %v508
    %v510 = vrot.slane %v470, 1
    %v511 = vsel %vm161, %v508, %v510
    %v512 = vrot.slane %v485, 1
    %v513 = vsel %vm161, %v510, %v512
    %v519 = vsel %vm161, %v512, %v507
    %v520 = vsel %vm157, 0.0, %v509
    %v521 = vsel %vm158, 0.0, %v511
    %v522 = vsel %vm159, 0.0, %v513
    %v523 = vsel %vm160, 0.0, %v519
    %v524 = vld [vmem:[#allocation7] sm:$0xff]
    %v525 = vld [vmem:[#allocation7 + $0x8] sm:$0xff]
    %v526 = vld [vmem:[#allocation7 + $0x10] sm:$0xff]
    %v527 = vld [vmem:[#allocation7 + $0x18] sm:$0xff]
    %v528 = vld [vmem:[#allocation7 + $0x20] sm:$0xff]
    %v529 = vld [vmem:[#allocation7 + $0x28] sm:$0xff]
    %v530 = vld [vmem:[#allocation7 + $0x30] sm:$0xff]
    %v531 = vld [vmem:[#allocation7 + $0x38] sm:$0xff]
    %v532 = vld [vmem:[#allocation7 + $0x40] sm:$0xff]
    %v533 = vld [vmem:[#allocation7 + $0x48] sm:$0xff]
    %v534 = vld [vmem:[#allocation7 + $0x50] sm:$0xff]
    %v535 = vld [vmem:[#allocation7 + $0x58] sm:$0xff]
    %v536 = vld [vmem:[#allocation7 + $0x60] sm:$0xff]
    %v537 = vld [vmem:[#allocation7 + $0x68] sm:$0xff]
    %v538 = vld [vmem:[#allocation7 + $0x70] sm:$0xff]
    %v539 = vld [vmem:[#allocation7 + $0x78] sm:$0xff]
    %v540 = vld [vmem:[#allocation7 + $0x80] sm:$0xff]
    %v541 = vld [vmem:[#allocation7 + $0x88] sm:$0xff]
    %v542 = vld [vmem:[#allocation7 + $0x90] sm:$0xff]
    %v543 = vld [vmem:[#allocation7 + $0x98] sm:$0xff]
    %v544 = vld [vmem:[#allocation7 + $0xa0] sm:$0xff]
    %v545 = vld [vmem:[#allocation7 + $0xa8] sm:$0xff]
    %v546 = vld [vmem:[#allocation7 + $0xb0] sm:$0xff]
    %v547 = vld [vmem:[#allocation7 + $0xb8] sm:$0xff]
    %v548 = vld [vmem:[#allocation7 + $0xc0] sm:$0xff]
    %v549 = vld [vmem:[#allocation7 + $0xc8] sm:$0xff]
    %v550 = vld [vmem:[#allocation7 + $0xd0] sm:$0xff]
    %v551 = vld [vmem:[#allocation7 + $0xd8] sm:$0xff]
    %v552 = vld [vmem:[#allocation7 + $0xe0] sm:$0xff]
    %v553 = vld [vmem:[#allocation7 + $0xe8] sm:$0xff]
    %v554 = vld [vmem:[#allocation7 + $0xf0] sm:$0xff]
    %v555 = vld [vmem:[#allocation7 + $0xf8] sm:$0xff]
    %v556 = vld [vmem:[#allocation7 + $0x100] sm:$0xff]
    %v557 = vld [vmem:[#allocation7 + $0x108] sm:$0xff]
    %v558 = vld [vmem:[#allocation7 + $0x110] sm:$0xff]
    %v559 = vld [vmem:[#allocation7 + $0x118] sm:$0xff]
    %v560 = vld [vmem:[#allocation7 + $0x120] sm:$0xff]
    %v561 = vld [vmem:[#allocation7 + $0x128] sm:$0xff]
    %v562 = vld [vmem:[#allocation7 + $0x130] sm:$0xff]
    %v563 = vld [vmem:[#allocation7 + $0x138] sm:$0xff]
    %v564 = vld [vmem:[#allocation7 + $0x140] sm:$0xff]
    %v565 = vld [vmem:[#allocation7 + $0x148] sm:$0xff]
    %v566 = vld [vmem:[#allocation7 + $0x150] sm:$0xff]
    %v567 = vld [vmem:[#allocation7 + $0x158] sm:$0xff]
    %v568 = vld [vmem:[#allocation7 + $0x160] sm:$0xff]
    %v569 = vld [vmem:[#allocation7 + $0x168] sm:$0xff]
    %v570 = vld [vmem:[#allocation7 + $0x170] sm:$0xff]
    %v571 = vld [vmem:[#allocation7 + $0x178] sm:$0xff]
    %572 = vmatpush.msra.mxu0 %v539
    %573 = vmatpush.msra.mxu0 %v538
    %574 = vmatpush.msra.mxu0 %v537
    %575 = vmatpush.msra.mxu0 %v536
    %576 = vmatpush.msra.mxu0 %v535
    %577 = vmatpush.msra.mxu0 %v534
    %578 = vmatpush.msra.mxu0 %v533
    %579 = vmatpush.msra.mxu0 %v532
    %580 = vmatpush.msra.mxu0 %v531
    %581 = vmatpush.msra.mxu0 %v530
    %582 = vmatpush.msra.mxu0 %v529
    %583 = vmatpush.msra.mxu0 %v528
    %584 = vmatpush.msra.mxu0 %v527
    %585 = vmatpush.msra.mxu0 %v526
    %586 = vmatpush.msra.mxu0 %v525
    %587 = vmatpush.msra.mxu0 %v524
    %588 = vmatmul.f32.gmra.mxu0 %v503
    %v589 = vpop.f32.mrf.mxu0
    %v590 = vadd.f32 0.0, %v589
    %591 = vmatmul.f32.gmra.mxu0 %v504
    %v592 = vpop.f32.mrf.mxu0
    %v593 = vadd.f32 0.0, %v592
    %594 = vmatmul.f32.gmra.mxu0 %v505
    %v595 = vpop.f32.mrf.mxu0
    %v596 = vadd.f32 0.0, %v595
    %597 = vmatmul.f32.gmra.mxu0 %v506
    %v598 = vpop.f32.mrf.mxu0
    %v599 = vadd.f32 0.0, %v598
    %600 = vdwg.mxu0
    %601 = vmatpush.msra.mxu0 %v555
    %602 = vmatpush.msra.mxu0 %v554
    %603 = vmatpush.msra.mxu0 %v553
    %604 = vmatpush.msra.mxu0 %v552
    %605 = vmatpush.msra.mxu0 %v551
    %606 = vmatpush.msra.mxu0 %v550
    %607 = vmatpush.msra.mxu0 %v549
    %608 = vmatpush.msra.mxu0 %v548
    %609 = vmatpush.msra.mxu0 %v547
    %610 = vmatpush.msra.mxu0 %v546
    %611 = vmatpush.msra.mxu0 %v545
    %612 = vmatpush.msra.mxu0 %v544
    %613 = vmatpush.msra.mxu0 %v543
    %614 = vmatpush.msra.mxu0 %v542
    %615 = vmatpush.msra.mxu0 %v541
    %616 = vmatpush.msra.mxu0 %v540
    %617 = vmatmul.f32.gmra.mxu0 %v440
    %v618 = vpop.f32.mrf.mxu0
    %v619 = vadd.f32 %v590, %v618
    %620 = vmatmul.f32.gmra.mxu0 %v455
    %v621 = vpop.f32.mrf.mxu0
    %v622 = vadd.f32 %v593, %v621
    %623 = vmatmul.f32.gmra.mxu0 %v470
    %v624 = vpop.f32.mrf.mxu0
    %v625 = vadd.f32 %v596, %v624
    %626 = vmatmul.f32.gmra.mxu0 %v485
    %v627 = vpop.f32.mrf.mxu0
    %v628 = vadd.f32 %v599, %v627
    %629 = vdwg.mxu0
    %630 = vmatpush.msra.mxu0 %v571
    %631 = vmatpush.msra.mxu0 %v570
    %632 = vmatpush.msra.mxu0 %v569
    %633 = vmatpush.msra.mxu0 %v568
    %634 = vmatpush.msra.mxu0 %v567
    %635 = vmatpush.msra.mxu0 %v566
    %636 = vmatpush.msra.mxu0 %v565
    %637 = vmatpush.msra.mxu0 %v564
    %638 = vmatpush.msra.mxu0 %v563
    %639 = vmatpush.msra.mxu0 %v562
    %640 = vmatpush.msra.mxu0 %v561
    %641 = vmatpush.msra.mxu0 %v560
    %642 = vmatpush.msra.mxu0 %v559
    %643 = vmatpush.msra.mxu0 %v558
    %644 = vmatpush.msra.mxu0 %v557
    %645 = vmatpush.msra.mxu0 %v556
    %646 = vmatmul.f32.gmra.mxu0 %v520
    %v647 = vpop.f32.mrf.mxu0
    %v648 = vadd.f32 %v619, %v647
    %649 = vmatmul.f32.gmra.mxu0 %v521
    %v650 = vpop.f32.mrf.mxu0
    %v651 = vadd.f32 %v622, %v650
    %652 = vmatmul.f32.gmra.mxu0 %v522
    %v653 = vpop.f32.mrf.mxu0
    %v654 = vadd.f32 %v625, %v653
    %655 = vmatmul.f32.gmra.mxu0 %v523
    %v656 = vpop.f32.mrf.mxu0
    %v657 = vadd.f32 %v628, %v656
    %658 = vdwg.mxu0
    %v659 = vld [vmem:[%s5] sm:$0x1]
    %v660 = vld [vmem:[%s6] sm:$0x1]
    %v661 = vadd.f32 %v648, %v651
    %v662 = vadd.f32 %v661, %v654
    %v663 = vadd.f32 %v662, %v657
    %v664 = vrot.slane %v663, 4
    %v665 = vadd.f32 %v663, %v664
    %v666 = vrot.slane %v665, 2
    %v667 = vadd.f32 %v665, %v666
    %v668 = vrot.slane %v667, 1
    %v669 = vadd.f32 %v667, %v668
    %670 = vrot.lane.b32.xlu0 %v669, 8
    %v671 = vpop.permute.xlu0 %670
    %v672 = vadd.f32 %v669, %v671
    %673 = vrot.lane.b32.xlu0 %v672, 16
    %v674 = vpop.permute.xlu0 %673
    %v675 = vadd.f32 %v672, %v674
    %676 = vrot.lane.b32.xlu0 %v675, 32
    %v677 = vpop.permute.xlu0 %676
    %v678 = vadd.f32 %v675, %v677
    %679 = vrot.lane.b32.xlu0 %v678, 64
    %v680 = vpop.permute.xlu0 %679
    %v681 = vadd.f32 %v678, %v680
    %v682 = vmul.f32 %v681, 0.001953125
    %v683 = vperm.slane %v682, 0
    %v684 = vsub.f32 %v648, %v683
    %v685 = vsub.f32 %v651, %v683
    %v686 = vsub.f32 %v654, %v683
    %v687 = vsub.f32 %v657, %v683
    %v688 = vmul.f32 %v684, %v684
    %v689 = vmul.f32 %v685, %v685
    %v690 = vmul.f32 %v686, %v686
    %v691 = vmul.f32 %v687, %v687
    %v692 = vadd.f32 %v688, %v689
    %v693 = vadd.f32 %v692, %v690
    %v694 = vadd.f32 %v693, %v691
    %v695 = vrot.slane %v694, 4
    %v696 = vadd.f32 %v694, %v695
    %v697 = vrot.slane %v696, 2
    %v698 = vadd.f32 %v696, %v697
    %v699 = vrot.slane %v698, 1
    %v700 = vadd.f32 %v698, %v699
    %701 = vrot.lane.b32.xlu0 %v700, 8
    %v702 = vpop.permute.xlu0 %701
    %v703 = vadd.f32 %v700, %v702
    %704 = vrot.lane.b32.xlu0 %v703, 16
    %v705 = vpop.permute.xlu0 %704
    %v706 = vadd.f32 %v703, %v705
    %707 = vrot.lane.b32.xlu0 %v706, 32
    %v708 = vpop.permute.xlu0 %707
    %v709 = vadd.f32 %v706, %v708
    %710 = vrot.lane.b32.xlu0 %v709, 64
    %v711 = vpop.permute.xlu0 %710
    %v712 = vadd.f32 %v709, %v711
    %v713 = vmul.f32 %v712, 0.001953125
    %v714 = vadd.f32 %v713, 1e-05
    %v715 = vrsqrt.pop %v714
    %v716 = vmul.f32 %v715, %v714
    %v717 = vmul.f32 %v716, %v715
    %v718 = vmul.f32 0.5, %v717
    %v719 = vsub.f32 1.5, %v718
    %v720 = vmul.f32 %v715, %v719
    %vm721 = vweird.f32 %v714
    %vm722 = vweird.f32 %v715
    %vm723 = vmor %vm721, %vm722
    %v724 = vsel %vm723, %v715, %v720
    %v725 = vmul.f32 %v659, %v724
    %v727 = vperm.slane %v725, 0
    %v729 = vmul.f32 %v684, %v727
    %v730 = vmul.f32 %v685, %v727
    %v731 = vmul.f32 %v686, %v727
    %v732 = vmul.f32 %v687, %v727
    %v734 = vperm.slane %v660, 0
    %v736 = vadd.f32 %v729, %v734
    %v737 = vadd.f32 %v730, %v734
    %v738 = vadd.f32 %v731, %v734
    %v739 = vadd.f32 %v732, %v734
    %v740 = vxor.u32 %v736, 2147483648
    %v741 = vxor.u32 %v737, 2147483648
    %v742 = vxor.u32 %v738, 2147483648
    %v743 = vxor.u32 %v739, 2147483648
    %v744 = vmul.f32 %v740, 1.442695
    %v745 = vpow.pop %v744
    %v746 = vmul.f32 %v741, 1.442695
    %v747 = vpow.pop %v746
    %v748 = vmul.f32 %v742, 1.442695
    %v749 = vpow.pop %v748
    %v750 = vmul.f32 %v743, 1.442695
    %v751 = vpow.pop %v750
    %v752 = vadd.f32 %v745, 1.0
    %v753 = vadd.f32 %v747, 1.0
    %v754 = vadd.f32 %v749, 1.0
    %v755 = vadd.f32 %v751, 1.0
    %v756 = vrcp.pop %v752
    %v757 = vmul.f32 %v752, %v756
    %v758 = vsub.f32 1.0, %v757
    %v759 = vmul.f32 %v756, %v758
    %v760 = vadd.f32 %v756, %v759
    %vm761 = vweird.f32 %v752
    %vm762 = vweird.f32 %v756
    %vm763 = vmor %vm761, %vm762
    %v764 = vsel %vm763, %v756, %v760
    %v765 = vand.u32 2147483647, %v752
    %vm766 = vcmp.eq.f32.partialorder %v765, 8.507059e+37
    %v767 = vand.u32 %v752, 2147483648
    %v768 = vor.u32 1.1754944e-38, %v767
    %v769 = vsel %vm766, %v768, %v764
    %v770 = vmul.f32 1.0, %v769
    %v771 = vrcp.pop %v753
    %v772 = vmul.f32 %v753, %v771
    %v773 = vsub.f32 1.0, %v772
    %v774 = vmul.f32 %v771, %v773
    %v775 = vadd.f32 %v771, %v774
    %vm776 = vweird.f32 %v753
    %vm777 = vweird.f32 %v771
    %vm778 = vmor %vm776, %vm777
    %v779 = vsel %vm778, %v771, %v775
    %v780 = vand.u32 2147483647, %v753
    %vm781 = vcmp.eq.f32.partialorder %v780, 8.507059e+37
    %v782 = vand.u32 %v753, 2147483648
    %v783 = vor.u32 1.1754944e-38, %v782
    %v784 = vsel %vm781, %v783, %v779
    %v785 = vmul.f32 1.0, %v784
    %v786 = vrcp.pop %v754
    %v787 = vmul.f32 %v754, %v786
    %v788 = vsub.f32 1.0, %v787
    %v789 = vmul.f32 %v786, %v788
    %v790 = vadd.f32 %v786, %v789
    %vm791 = vweird.f32 %v754
    %vm792 = vweird.f32 %v786
    %vm793 = vmor %vm791, %vm792
    %v794 = vsel %vm793, %v786, %v790
    %v795 = vand.u32 2147483647, %v754
    %vm796 = vcmp.eq.f32.partialorder %v795, 8.507059e+37
    %v797 = vand.u32 %v754, 2147483648
    %v798 = vor.u32 1.1754944e-38, %v797
    %v799 = vsel %vm796, %v798, %v794
    %v800 = vmul.f32 1.0, %v799
    %v801 = vrcp.pop %v755
    %v802 = vmul.f32 %v755, %v801
    %v803 = vsub.f32 1.0, %v802
    %v804 = vmul.f32 %v801, %v803
    %v805 = vadd.f32 %v801, %v804
    %vm806 = vweird.f32 %v755
    %vm807 = vweird.f32 %v801
    %vm808 = vmor %vm806, %vm807
    %v809 = vsel %vm808, %v801, %v805
    %v810 = vand.u32 2147483647, %v755
    %vm811 = vcmp.eq.f32.partialorder %v810, 8.507059e+37
    %v812 = vand.u32 %v755, 2147483648
    %v813 = vor.u32 1.1754944e-38, %v812
    %v814 = vsel %vm811, %v813, %v809
    %v815 = vmul.f32 1.0, %v814
    %816 = vst [vmem:[#allocation8] sm:$0xff] %v770
    %817 = vst [vmem:[#allocation8 + $0x8] sm:$0xff] %v785
    %818 = vst [vmem:[#allocation8 + $0x10] sm:$0xff] %v800
    %819 = vst [vmem:[#allocation8 + $0x18] sm:$0xff] %v815
    // Predicated region
    $region42: #{tpu_custom_call.1} parent=1 // pred_check
      _
    $region43: #{tpu_custom_call.1} parent=1 // pred_check_branch
      %821 = sbr.rel (0) target = $region45
    $region44: #{tpu_custom_call.1} parent=1 // pred_region
      %823 = vsyncadd [#allocation4], 0
      %s824 = sshll.u32 [#allocation8], 4
      %s825 = int_to_ptr.vmem [resolvable:$true] %s824
      %s826 = sshll.u32 %s7, 4
      %s827 = int_to_ptr.hbm [resolvable:$true] %s826
      %832 = dma.vmem_to_hbm [thread:$0]  %s825, 512, %s827, [#allocation4], 128, 128, 8
    $region45: #{tpu_custom_call.1} parent=1 // pred_fallthru
      _
    // Predicated region
    $region46: #{tpu_custom_call.1} parent=1 // pred_check
      _
    $region47: #{tpu_custom_call.1} parent=1 // pred_check_branch
      %834 = sbr.rel (0) target = $region49
    $region48: #{tpu_custom_call.1} parent=1 // pred_region
      %836 = dma.done [#allocation4], 512
    $region49: #{tpu_custom_call.1} parent=1 // pred_fallthru
      _
    %837 = vsyncpa [#allocation3], 1
    %838 = vsyncpa [#allocation6], 1
    %839 = vsyncpa [#allocation4], 1

</llo_original>
